<compile_context>
chip_gen: v7x
topology: tpu7x:2x2x1
jax: 0.10.0
libtpu: 0.0.40
codegen_flags: <defaults>
</compile_context>

<pallas_src>
import functools

import jax
import jax.numpy as jnp
from jax.experimental import pallas as pl
from jax.experimental.pallas import tpu as pltpu


def se_kernel(x_ref, w1t_ref, b1_ref, w2t_ref, b2_ref, o_ref, *, inv_hw):
    # x_ref: (NB, C, HWp); w1t: (C, w_se); b1: (1, w_se); w2t: (w_se, C); b2: (1, C)
    x = x_ref[...]
    xf = x.astype(jnp.float32)                                   # f32 compute path
    # Squeeze: global average pool over the (zero-padded) spatial/lane axis.
    # Padded lanes are zero so they do not perturb the sum; divide by true HW.
    s = jnp.sum(xf, axis=-1) * inv_hw                            # (NB, C)
    # Excitation: 1x1 conv -> ReLU -> 1x1 conv -> Sigmoid, batched over NB.
    z = jnp.dot(s, w1t_ref[...], preferred_element_type=jnp.float32) + b1_ref[...]
    z = jnp.maximum(z, 0.0)                                      # (NB, w_se)
    t = jnp.dot(z, w2t_ref[...], preferred_element_type=jnp.float32) + b2_ref[...]
    gate = jax.nn.sigmoid(t)                                     # (NB, C)
    # Scale: broadcast gate over the spatial (lane) axis; store in I/O dtype.
    o_ref[...] = (xf * gate[:, :, None]).astype(o_ref.dtype)


def se_forward(x, w1, b1, w2, b2, *, max_block_bytes=4 << 20):
    """x: (N, C, H, W).  w1: (w_se, C), b1: (w_se,), w2: (C, w_se), b2: (C,)."""
    N, C, H, W = x.shape
    HW = H * W
    w_se = w1.shape[0]
    itemsize = jnp.dtype(x.dtype).itemsize

    # Lane-dense layout: pad the flattened spatial axis to a multiple of 128 so
    # loads/stores are full vregs rather than masked partial stores.
    HWp = HW if HW % 128 == 0 else ((HW + 127) // 128) * 128

    x2 = x.reshape(N, C, HW)
    if HWp != HW:
        x2 = jnp.pad(x2, ((0, 0), (0, 0), (0, HWp - HW)))

    # Batch NB images per grid step: fewer grid steps / bigger DMAs, bounded by
    # a per-block VMEM budget.  Keep >= 2 grid steps when possible so both
    # TensorCores get work on megacore parts (v7x).
    per_image_bytes = C * HWp * itemsize
    nb = max(1, min(8, max_block_bytes // max(per_image_bytes, 1)))
    if N >= 2:
        nb = min(nb, -(-N // 2))
    nb = min(nb, N)

    Np = -(-N // nb) * nb
    if Np != N:
        # Zero-pad the batch; padded images produce zero output and are sliced off.
        x2 = jnp.pad(x2, ((0, Np - N), (0, 0), (0, 0)))
    grid = (Np // nb,)

    # Pre-transpose weights so the kernel's matmuls contract over C / w_se
    # without in-kernel transposes.
    w1t = w1.T                      # (C, w_se)
    w2t = w2.T                      # (w_se, C)
    b1r = b1.reshape(1, w_se)
    b2r = b2.reshape(1, C)

    # Explicit VMEM budget: 2x input + 2x output double-buffered blocks plus
    # resident weights and slack.  Clamped to stay within v7x's 64 MiB VMEM.
    block_bytes = nb * per_image_bytes
    weight_bytes = (w1t.size + w2t.size + b1r.size + b2r.size) * 4
    vmem_needed = 4 * block_bytes + weight_bytes + (2 << 20)
    vmem_limit = int(min(max(vmem_needed, 32 << 20), 48 << 20))
    # TODO(synk): add a two-pass HW-tiled variant (pool pass + scale pass) for
    # oversized single images whose pipelined blocks exceed the VMEM budget.

    cost = pl.CostEstimate(
        flops=2 * Np * C * HWp + 4 * Np * C * w_se,
        transcendentals=Np * C,                       # sigmoid
        bytes_accessed=2 * Np * C * HWp * itemsize,   # one read + one write
    )

    kernel = functools.partial(se_kernel, inv_hw=1.0 / HW)

    out = pl.pallas_call(
        kernel,
        out_shape=jax.ShapeDtypeStruct((Np, C, HWp), x.dtype),
        grid_spec=pltpu.PrefetchScalarGridSpec(
            num_scalar_prefetch=0,
            grid=grid,
            in_specs=[
                pl.BlockSpec((nb, C, HWp), lambda n: (n, 0, 0)),
                pl.BlockSpec((C, w_se), lambda n: (0, 0)),
                pl.BlockSpec((1, w_se), lambda n: (0, 0)),
                pl.BlockSpec((w_se, C), lambda n: (0, 0)),
                pl.BlockSpec((1, C), lambda n: (0, 0)),
            ],
            out_specs=pl.BlockSpec((nb, C, HWp), lambda n: (n, 0, 0)),
        ),
        compiler_params=pltpu.CompilerParams(
            dimension_semantics=("parallel",),
            vmem_limit_bytes=vmem_limit,
        ),
        cost_estimate=cost,
    )(x2, w1t, b1r, w2t, b2r)

    out = out[:N, :, :HW]
    return out.reshape(N, C, H, W)


def se_reference(x, w1, b1, w2, b2):
    """Pure-JAX reference matching the PyTorch SE forward."""
    s = jnp.mean(x.astype(jnp.float32), axis=(2, 3), keepdims=True)  # (N, C, 1, 1)
    z = jnp.einsum("sc,nchw->nshw", w1, s) + b1[None, :, None, None]
    z = jax.nn.relu(z)
    t = jnp.einsum("cs,nshw->nchw", w2, z) + b2[None, :, None, None]
    g = jax.nn.sigmoid(t)
    return (x.astype(jnp.float32) * g).astype(x.dtype)


if __name__ == "__main__":
    # Small shapes consistent with the module: w_in=4 channels, w_se=2.
    N, C, H, W = 4, 4, 16, 16
    W_SE = 2

    key = jax.random.PRNGKey(0)
    kx, k1, k2, k3, k4 = jax.random.split(key, 5)

    x = jax.random.normal(kx, (N, C, H, W), dtype=jnp.float32)
    # "Conv2d 1x1" parameters (weight shape (out, in), bias (out,)).
    w1 = jax.random.normal(k1, (W_SE, C), dtype=jnp.float32) * 0.1
    b1 = jax.random.normal(k2, (W_SE,), dtype=jnp.float32) * 0.1
    w2 = jax.random.normal(k3, (C, W_SE), dtype=jnp.float32) * 0.1
    b2 = jax.random.normal(k4, (C,), dtype=jnp.float32) * 0.1

    out = se_forward(x, w1, b1, w2, b2)
    jax.block_until_ready(out)

    ref = se_reference(x, w1, b1, w2, b2)
    assert out.shape == (N, C, H, W)
    assert jnp.allclose(out, ref, atol=1e-5, rtol=1e-5), "mismatch vs reference"

    # Secondary check: non-128-aligned spatial (realistic SE placement, HW=49)
    # exercises the lane-padding path.
    x_small = jax.random.normal(kx, (2, C, 7, 7), dtype=jnp.float32)
    out2 = se_forward(x_small, w1, b1, w2, b2)
    jax.block_until_ready(out2)
    ref2 = se_reference(x_small, w1, b1, w2, b2)
    assert jnp.allclose(out2, ref2, atol=1e-5, rtol=1e-5), "mismatch (padded HW)"

    print("KERNEL_OK")
</pallas_src>

<mosaic_0001>
module attributes {stable_mosaic.version = 11 : i64} {
  func.func @se_kernel(%arg0: i32, %arg1: memref<2x4x256xf32, #tpu.memory_space<vmem>>, %arg2: memref<4x2xf32, #tpu.memory_space<vmem>>, %arg3: memref<1x2xf32, #tpu.memory_space<vmem>>, %arg4: memref<2x4xf32, #tpu.memory_space<vmem>>, %arg5: memref<1x4xf32, #tpu.memory_space<vmem>>, %arg6: memref<2x4x256xf32, #tpu.memory_space<vmem>>) attributes {dimension_semantics = [#tpu.dimension_semantics<parallel>], iteration_bounds = array<i64: 2>, scalar_prefetch = 0 : i64, scratch_operands = 0 : i64, tpu.core_type = #tpu.core_type<tc>, window_params = [{transform_indices = @transform_0, window_bounds = array<i64: 2, 4, 256>}, {pipeline_mode = #tpu.pipeline_mode<synchronous>, transform_indices = @transform_1, window_bounds = array<i64: 4, 2>}, {pipeline_mode = #tpu.pipeline_mode<synchronous>, transform_indices = @transform_2, window_bounds = array<i64: 1, 2>}, {pipeline_mode = #tpu.pipeline_mode<synchronous>, transform_indices = @transform_3, window_bounds = array<i64: 2, 4>}, {pipeline_mode = #tpu.pipeline_mode<synchronous>, transform_indices = @transform_4, window_bounds = array<i64: 1, 4>}, {transform_indices = @transform_5, window_bounds = array<i64: 2, 4, 256>}]} {
    %c0 = arith.constant 0 : index
    %c0_0 = arith.constant 0 : index
    %c0_1 = arith.constant 0 : index
    %0 = vector.load %arg1[%c0, %c0_0, %c0_1] : memref<2x4x256xf32, #tpu.memory_space<vmem>>, vector<2x4x256xf32>
    %cst = arith.constant dense<0.000000e+00> : vector<2x4xf32>
    %1 = vector.multi_reduction <add>, %0, %cst [2] : vector<2x4x256xf32> to vector<2x4xf32>
    %cst_2 = arith.constant 3.906250e-03 : f32
    %2 = vector.broadcast %cst_2 : f32 to vector<2x4xf32>
    %3 = arith.mulf %1, %2 : vector<2x4xf32>
    %c0_3 = arith.constant 0 : index
    %c0_4 = arith.constant 0 : index
    %4 = vector.load %arg2[%c0_3, %c0_4] : memref<4x2xf32, #tpu.memory_space<vmem>>, vector<4x2xf32>
    %cst_5 = arith.constant dense<0.000000e+00> : vector<2x2xf32>
    %5 = tpu.matmul %3, %4, %cst_5 {dimension_numbers = #tpu.dot_dimension_numbers<[1], [0], [0], [1], [0, 0, 1, 1], [], []>} : vector<2x4xf32>, vector<4x2xf32>, vector<2x2xf32> -> vector<2x2xf32>
    %c0_6 = arith.constant 0 : index
    %c0_7 = arith.constant 0 : index
    %6 = vector.load %arg3[%c0_6, %c0_7] : memref<1x2xf32, #tpu.memory_space<vmem>>, vector<1x2xf32>
    %7 = vector.broadcast %6 : vector<1x2xf32> to vector<2x2xf32>
    %8 = arith.addf %5, %7 : vector<2x2xf32>
    %cst_8 = arith.constant 0.000000e+00 : f32
    %9 = vector.broadcast %cst_8 : f32 to vector<2x2xf32>
    %10 = arith.maximumf %8, %9 : vector<2x2xf32>
    %c0_9 = arith.constant 0 : index
    %c0_10 = arith.constant 0 : index
    %11 = vector.load %arg4[%c0_9, %c0_10] : memref<2x4xf32, #tpu.memory_space<vmem>>, vector<2x4xf32>
    %cst_11 = arith.constant dense<0.000000e+00> : vector<2x4xf32>
    %12 = tpu.matmul %10, %11, %cst_11 {dimension_numbers = #tpu.dot_dimension_numbers<[1], [0], [0], [1], [0, 0, 1, 1], [], []>} : vector<2x2xf32>, vector<2x4xf32>, vector<2x4xf32> -> vector<2x4xf32>
    %c0_12 = arith.constant 0 : index
    %c0_13 = arith.constant 0 : index
    %13 = vector.load %arg5[%c0_12, %c0_13] : memref<1x4xf32, #tpu.memory_space<vmem>>, vector<1x4xf32>
    %14 = vector.broadcast %13 : vector<1x4xf32> to vector<2x4xf32>
    %15 = arith.addf %12, %14 : vector<2x4xf32>
    %16 = arith.negf %15 : vector<2x4xf32>
    %17 = math.exp %16 : vector<2x4xf32>
    %cst_14 = arith.constant 1.000000e+00 : f32
    %18 = vector.broadcast %cst_14 : f32 to vector<2x4xf32>
    %19 = arith.addf %18, %17 : vector<2x4xf32>
    %20 = arith.divf %18, %19 : vector<2x4xf32>
    %21 = vector.shape_cast %20 : vector<2x4xf32> to vector<2x4x1xf32>
    %22 = vector.broadcast %21 : vector<2x4x1xf32> to vector<2x4x256xf32>
    %23 = arith.mulf %0, %22 : vector<2x4x256xf32>
    %c0_15 = arith.constant 0 : index
    %c0_16 = arith.constant 0 : index
    %c0_17 = arith.constant 0 : index
    %24 = vector.load %arg6[%c0_15, %c0_16, %c0_17] : memref<2x4x256xf32, #tpu.memory_space<vmem>>, vector<2x4x256xf32>
    tpu.vector_store %arg6[%c0_15, %c0_16, %c0_17], %23 {strides = array<i32>} : memref<2x4x256xf32, #tpu.memory_space<vmem>>, vector<2x4x256xf32>,
    return
  }
  func.func @transform_0(%arg0: i32) -> (i32, i32, i32) {
    %c0_i32 = arith.constant 0 : i32
    %c0_i32_0 = arith.constant 0 : i32
    %c0_i32_1 = arith.constant 0 : i32
    return %arg0, %c0_i32, %c0_i32_0 : i32, i32, i32
  }
  func.func @transform_1(%arg0: i32) -> (i32, i32) {
    %c0_i32 = arith.constant 0 : i32
    %c0_i32_0 = arith.constant 0 : i32
    %c0_i32_1 = arith.constant 0 : i32
    return %c0_i32, %c0_i32_0 : i32, i32
  }
  func.func @transform_2(%arg0: i32) -> (i32, i32) {
    %c0_i32 = arith.constant 0 : i32
    %c0_i32_0 = arith.constant 0 : i32
    %c0_i32_1 = arith.constant 0 : i32
    return %c0_i32, %c0_i32_0 : i32, i32
  }
  func.func @transform_3(%arg0: i32) -> (i32, i32) {
    %c0_i32 = arith.constant 0 : i32
    %c0_i32_0 = arith.constant 0 : i32
    %c0_i32_1 = arith.constant 0 : i32
    return %c0_i32, %c0_i32_0 : i32, i32
  }
  func.func @transform_4(%arg0: i32) -> (i32, i32) {
    %c0_i32 = arith.constant 0 : i32
    %c0_i32_0 = arith.constant 0 : i32
    %c0_i32_1 = arith.constant 0 : i32
    return %c0_i32, %c0_i32_0 : i32, i32
  }
  func.func @transform_5(%arg0: i32) -> (i32, i32, i32) {
    %c0_i32 = arith.constant 0 : i32
    %c0_i32_0 = arith.constant 0 : i32
    %c0_i32_1 = arith.constant 0 : i32
    return %arg0, %c0_i32, %c0_i32_0 : i32, i32, i32
  }
}

</mosaic_0001>

<llo_original>
// kernel: tpu_custom_call.1
$region0: #{tpu_custom_call.1}
  #allocation0 [shape = 'u32[]', space=smem, size = 0x4, offset = 0x4, fixed_abs, tag = 'smem constant byte address 0x4 - core index']
  #allocation1 [shape = 'u32[144,128]{1,0:T(1,128)}', space=vmem, size = 0x12000, scoped, tag = 'internal scratch']
  %s0 = inlined_call_operand.hbm [shape: f32[4,4,256], index: 0, kind: input, shape index: {}]
  %s1 = inlined_call_operand.vmem [shape: f32[4,2], index: 1, kind: input, shape index: {}]
  %s2 = inlined_call_operand.vmem [shape: f32[1,2], index: 2, kind: input, shape index: {}]
  %s3 = inlined_call_operand.vmem [shape: f32[2,4], index: 3, kind: input, shape index: {}]
  %s4 = inlined_call_operand.vmem [shape: f32[1,4], index: 4, kind: input, shape index: {}]
  %s5 = inlined_call_operand.hbm [shape: f32[4,4,256], index: 5, kind: output, shape index: {}]
  %s6 = sld [smem:[#allocation0]]
  $region57: #{tpu_custom_call.1} parent=0
    _
  %s8 = ssub.s32 1, %s6
  %s9 = scalar_select 0, %s8, %s6
  $region1: #{tpu_custom_call.1} parent=0
    #allocation2 [shape = 'u8[16384]{0}', space=vmem, size = 0x4000, scoped, tag = 'input window, operand 0']
    #allocation3 [shape = 's32[2]{0}', space=sflag, size = 0x8, scoped, tag = 'scoped memory for tpu_custom_call.1']
    #allocation4 [shape = 's32[2]{0}', space=sflag, size = 0x8, scoped, tag = 'scoped memory for tpu_custom_call.1']
    #allocation5 [shape = 'u8[16384]{0}', space=vmem, size = 0x4000, scoped, tag = 'output window, operand 0']
    %10 = vsyncpa [#allocation3], 0
    %s11 = scalar_lea.sflag [#allocation3], 1
    %12 = vsyncpa %s11, 0
    %13 = vsyncpa [#allocation4], 0
    %s14 = scalar_lea.sflag [#allocation4], 1
    %15 = vsyncpa %s14, 0
    loop: start=0, step=1, limit=4
    $region2: #{tpu_custom_call.1} parent=1 // loop_pre_header
      _
    $region3: #{tpu_custom_call.1} parent=1 // loop_header
      %s17 = sphi 0, %s21
      %p18 = scmp.ge.s32.totalorder %s17, 4
      %s27 = sphi 0, %s29
      %s30 = sphi 0, %s27
      %s31 = sphi 0, %s30
      %s47 = sphi 0, %s31
      %s51 = sphi 0, %s51
      %s53 = sphi 0, %s51
      %s54 = sphi 0, %s53
      %s68 = sphi 0, %s54
      %s72 = sphi 0, %s72
      %s74 = sphi 0, %s72
      %s75 = sphi 0, %s74
      %s89 = sphi 0, %s75
      %s93 = sphi 0, %s93
      %s95 = sphi 0, %s93
      %s96 = sphi 0, %s95
      %s110 = sphi 0, %s96
      %s114 = sphi 0, %s114
      %s116 = sphi 0, %s114
      %s117 = sphi 0, %s116
      %s131 = sphi 0, %s117
      %s137 = sphi 0, %s139
      %s140 = sphi 0, %s137
      %s141 = sphi 0, %s140
      %s157 = sphi 0, %s141
    $region4: #{tpu_custom_call.1} parent=1 // loop_header_branch
      %20 = sbr.rel (%p18) target = $region8
    $region5: #{tpu_custom_call.1} parent=1 // loop_body
      %s22 = ssub.s32 %s17, 1
      %s23 = ssub.s32 %s17, 2
      %s24 = sadd.s32 %s17, 1
      %s25 = ssub.s32 %s17, %s24
      %p26 = scmp.eq.s32.totalorder %s25, 0
      %s28 = sadd.s32 %s27, 1
      %s29 = scalar_select %p26, %s27, %s28
      %p32 = pneg %p26
      %p33 = scmp.eq.s32.totalorder %s17, 1
      %p34 = por %p32, %p33
      %p35 = scmp.ne.s32.totalorder %s27, %s30
      %p36 = scmp.eq.s32.totalorder %s17, 0
      %p37 = por %p35, %p36
      %p38 = scmp.ne.s32.totalorder %s27, %s30
      %p39 = scmp.eq.s32.totalorder %s22, 1
      %p40 = por %p38, %p39
      %p41 = scmp.ne.s32.totalorder %s30, %s31
      %p42 = scmp.eq.s32.totalorder %s22, 0
      %p43 = por %p41, %p42
      %p44 = scmp.ne.s32.totalorder %s30, %s31
      %p45 = scmp.eq.s32.totalorder %s23, 1
      %p46 = por %p44, %p45
      %p48 = scmp.ne.s32.totalorder %s31, %s47
      %p49 = scmp.eq.s32.totalorder %s23, 0
      %p50 = por %p48, %p49
      %s52 = sadd.s32 %s51, 1
      %p55 = scmp.eq.s32.totalorder %s17, 1
      %p56 = scmp.ne.s32.totalorder %s51, %s53
      %p57 = scmp.eq.s32.totalorder %s17, 0
      %p58 = por %p56, %p57
      %p59 = scmp.ne.s32.totalorder %s51, %s53
      %p60 = scmp.eq.s32.totalorder %s22, 1
      %p61 = por %p59, %p60
      %p62 = scmp.ne.s32.totalorder %s53, %s54
      %p63 = scmp.eq.s32.totalorder %s22, 0
      %p64 = por %p62, %p63
      %p65 = scmp.ne.s32.totalorder %s53, %s54
      %p66 = scmp.eq.s32.totalorder %s23, 1
      %p67 = por %p65, %p66
      %p69 = scmp.ne.s32.totalorder %s54, %s68
      %p70 = scmp.eq.s32.totalorder %s23, 0
      %p71 = por %p69, %p70
      %s73 = sadd.s32 %s72, 1
      %p76 = scmp.eq.s32.totalorder %s17, 1
      %p77 = scmp.ne.s32.totalorder %s72, %s74
      %p78 = scmp.eq.s32.totalorder %s17, 0
      %p79 = por %p77, %p78
      %p80 = scmp.ne.s32.totalorder %s72, %s74
      %p81 = scmp.eq.s32.totalorder %s22, 1
      %p82 = por %p80, %p81
      %p83 = scmp.ne.s32.totalorder %s74, %s75
      %p84 = scmp.eq.s32.totalorder %s22, 0
      %p85 = por %p83, %p84
      %p86 = scmp.ne.s32.totalorder %s74, %s75
      %p87 = scmp.eq.s32.totalorder %s23, 1
      %p88 = por %p86, %p87
      %p90 = scmp.ne.s32.totalorder %s75, %s89
      %p91 = scmp.eq.s32.totalorder %s23, 0
      %p92 = por %p90, %p91
      %s94 = sadd.s32 %s93, 1
      %p97 = scmp.eq.s32.totalorder %s17, 1
      %p98 = scmp.ne.s32.totalorder %s93, %s95
      %p99 = scmp.eq.s32.totalorder %s17, 0
      %p100 = por %p98, %p99
      %p101 = scmp.ne.s32.totalorder %s93, %s95
      %p102 = scmp.eq.s32.totalorder %s22, 1
      %p103 = por %p101, %p102
      %p104 = scmp.ne.s32.totalorder %s95, %s96
      %p105 = scmp.eq.s32.totalorder %s22, 0
      %p106 = por %p104, %p105
      %p107 = scmp.ne.s32.totalorder %s95, %s96
      %p108 = scmp.eq.s32.totalorder %s23, 1
      %p109 = por %p107, %p108
      %p111 = scmp.ne.s32.totalorder %s96, %s110
      %p112 = scmp.eq.s32.totalorder %s23, 0
      %p113 = por %p111, %p112
      %s115 = sadd.s32 %s114, 1
      %p118 = scmp.eq.s32.totalorder %s17, 1
      %p119 = scmp.ne.s32.totalorder %s114, %s116
      %p120 = scmp.eq.s32.totalorder %s17, 0
      %p121 = por %p119, %p120
      %p122 = scmp.ne.s32.totalorder %s114, %s116
      %p123 = scmp.eq.s32.totalorder %s22, 1
      %p124 = por %p122, %p123
      %p125 = scmp.ne.s32.totalorder %s116, %s117
      %p126 = scmp.eq.s32.totalorder %s22, 0
      %p127 = por %p125, %p126
      %p128 = scmp.ne.s32.totalorder %s116, %s117
      %p129 = scmp.eq.s32.totalorder %s23, 1
      %p130 = por %p128, %p129
      %p132 = scmp.ne.s32.totalorder %s117, %s131
      %p133 = scmp.eq.s32.totalorder %s23, 0
      %p134 = por %p132, %p133
      %s135 = ssub.s32 %s17, %s24
      %p136 = scmp.eq.s32.totalorder %s135, 0
      %s138 = sadd.s32 %s137, 1
      %s139 = scalar_select %p136, %s137, %s138
      %p142 = pneg %p136
      %p143 = scmp.eq.s32.totalorder %s17, 1
      %p144 = por %p142, %p143
      %p145 = scmp.ne.s32.totalorder %s137, %s140
      %p146 = scmp.eq.s32.totalorder %s17, 0
      %p147 = por %p145, %p146
      %p148 = scmp.ne.s32.totalorder %s137, %s140
      %p149 = scmp.eq.s32.totalorder %s22, 1
      %p150 = por %p148, %p149
      %p151 = scmp.ne.s32.totalorder %s140, %s141
      %p152 = scmp.eq.s32.totalorder %s22, 0
      %p153 = por %p151, %p152
      %p154 = scmp.ne.s32.totalorder %s140, %s141
      %p155 = scmp.eq.s32.totalorder %s23, 1
      %p156 = por %p154, %p155
      %p158 = scmp.ne.s32.totalorder %s141, %s157
      %p159 = scmp.eq.s32.totalorder %s23, 0
      %p160 = por %p158, %p159
      %p161 = scmp.le.s32.totalorder 1, %s17
      %p162 = scmp.lt.s32.totalorder %s17, 3
      %p163 = pnand %p161, %p162
      %p164 = pneg %p163
      // Predicated region
      $region9: #{tpu_custom_call.1} parent=5 // pred_check
        _
      $region10: #{tpu_custom_call.1} parent=5 // pred_check_branch
        %166 = sbr.rel (%p163) target = $region12
      $region11: #{tpu_custom_call.1} parent=5 // pred_region
        %s167 = ssub.s32 %s17, 1
        // Predicated region
        $region13: #{tpu_custom_call.1} parent=11 // pred_check
          %p168 = pneg %p64
        $region14: #{tpu_custom_call.1} parent=11 // pred_check_branch
          %170 = sbr.rel (%p168) target = $region16
        $region15: #{tpu_custom_call.1} parent=11 // pred_region
          _
        $region16: #{tpu_custom_call.1} parent=11 // pred_fallthru
          _
        // Predicated region
        $region17: #{tpu_custom_call.1} parent=11 // pred_check
          %p171 = pneg %p85
        $region18: #{tpu_custom_call.1} parent=11 // pred_check_branch
          %173 = sbr.rel (%p171) target = $region20
        $region19: #{tpu_custom_call.1} parent=11 // pred_region
          _
        $region20: #{tpu_custom_call.1} parent=11 // pred_fallthru
          _
        // Predicated region
        $region21: #{tpu_custom_call.1} parent=11 // pred_check
          %p174 = pneg %p106
        $region22: #{tpu_custom_call.1} parent=11 // pred_check_branch
          %176 = sbr.rel (%p174) target = $region24
        $region23: #{tpu_custom_call.1} parent=11 // pred_region
          _
        $region24: #{tpu_custom_call.1} parent=11 // pred_fallthru
          _
        // Predicated region
        $region25: #{tpu_custom_call.1} parent=11 // pred_check
          %p177 = pneg %p127
        $region26: #{tpu_custom_call.1} parent=11 // pred_check_branch
          %179 = sbr.rel (%p177) target = $region28
        $region27: #{tpu_custom_call.1} parent=11 // pred_region
          _
        $region28: #{tpu_custom_call.1} parent=11 // pred_fallthru
          _
      $region12: #{tpu_custom_call.1} parent=5 // pred_fallthru
        _
      %p180 = scmp.lt.s32.totalorder %s17, 2
      // Predicated region
      $region29: #{tpu_custom_call.1} parent=5 // pred_check
        %p181 = pneg %p180
      $region30: #{tpu_custom_call.1} parent=5 // pred_check_branch
        %183 = sbr.rel (%p181) target = $region32
      $region31: #{tpu_custom_call.1} parent=5 // pred_region
        // Predicated region
        $region33: #{tpu_custom_call.1} parent=31 // pred_check
          %p184 = pneg %p37
        $region34: #{tpu_custom_call.1} parent=31 // pred_check_branch
          %186 = sbr.rel (%p184) target = $region36
        $region35: #{tpu_custom_call.1} parent=31 // pred_region
          %s187 = sand.u32 %s27, 1
          %s188 = scalar_lea.sflag [#allocation3], %s187
          %s189 = sand.u32 %s27, 1
          %s190 = smul.addr %s189, 16
          %s191 = scalar_lea.vmem [#allocation2], %s190
          %s192 = smul.u32 2, %s17
          %s194 = ssub.s32 256, 256
          %195 = vsyncadd %s188, %s194
          %s196 = smul.addr %s192, 2
          %s197 = smul.addr %s196, 64
          %s198 = scalar_lea.hbm %s0, %s197
          %s199 = sshll.u32 %s191, 4
          %s200 = int_to_ptr.vmem [resolvable:$true] %s199
          %205 = dma.hbm_to_vmem [thread:$0]  %s198, 256, %s200, %s188, 128, 128, 8
        $region36: #{tpu_custom_call.1} parent=31 // pred_fallthru
          _
      $region32: #{tpu_custom_call.1} parent=5 // pred_fallthru
        _
      %p206 = scmp.le.s32.totalorder 1, %s17
      %p207 = scmp.lt.s32.totalorder %s17, 3
      %p208 = pnand %p206, %p207
      %p209 = pneg %p208
      // Predicated region
      $region37: #{tpu_custom_call.1} parent=5 // pred_check
        _
      $region38: #{tpu_custom_call.1} parent=5 // pred_check_branch
        %211 = sbr.rel (%p208) target = $region40
      $region39: #{tpu_custom_call.1} parent=5 // pred_region
        %s212 = ssub.s32 %s17, 1
        %s213 = sand.u32 %s30, 1
        %s214 = scalar_lea.sflag [#allocation3], %s213
        %s215 = sand.u32 %s30, 1
        %s216 = smul.addr %s215, 16
        %s217 = scalar_lea.vmem [#allocation2], %s216
        // Predicated region
        $region41: #{tpu_custom_call.1} parent=39 // pred_check
          %p218 = pneg %p43
        $region42: #{tpu_custom_call.1} parent=39 // pred_check_branch
          %220 = sbr.rel (%p218) target = $region44
        $region43: #{tpu_custom_call.1} parent=39 // pred_region
          %221 = dma.done %s214, 256
        $region44: #{tpu_custom_call.1} parent=39 // pred_fallthru
          _
        %s222 = sand.u32 %s30, 1
        %s223 = scalar_lea.sflag [#allocation3], %s222
        %s224 = sand.u32 %s30, 1
        %s225 = smul.addr %s224, 16
        %s226 = scalar_lea.vmem [#allocation2], %s225
        %p227 = pneg %p43
        %p228 = pneg %p40
        %p229 = pneg %p64
        %p230 = pneg %p61
        %p231 = pneg %p85
        %p232 = pneg %p82
        %p233 = pneg %p106
        %p234 = pneg %p103
        %p235 = pneg %p127
        %p236 = pneg %p124
        %p237 = pneg %p153
        %p238 = pneg %p150
        %s239 = sand.u32 %s140, 1
        %s240 = scalar_lea.sflag [#allocation4], %s239
        %s241 = sand.u32 %s140, 1
        %s242 = smul.addr %s241, 16
        %s243 = scalar_lea.vmem [#allocation5], %s242
        %s244 = smul.u32 2, %s22
        %s245 = smul.u32 2, %s22
        %v246 = vld [vmem:[%s217] sm:$0xff]
        %v247 = vld [vmem:[%s217 + $0x8] sm:$0xff]
        %v250 = vcombine.high %v246, %v246
        %v251 = vcombine.high %v247, %v247
        %vm254 = vcmask 1043456
        %v255 = vsel %vm254, %v246, 0.0
        %v256 = vsel %vm254, %v250, 0.0
        %v257 = vadd.f32 %v255, %v256
        %258 = vadd.xlane.f32.xlu0 %v257
        %v259 = vpop.xlane.xlu0 %258
        %v260 = vsel %vm254, %v247, 0.0
        %v261 = vsel %vm254, %v251, 0.0
        %v262 = vadd.f32 %v260, %v261
        %263 = vadd.xlane.f32.xlu0 %v262
        %v264 = vpop.xlane.xlu0 %263
        %v265 = vmul.f32 %v259, 0.00390625
        %v266 = vmul.f32 %v264, 0.00390625
        %v267 = vld [vmem:[%s1] sm:$0xf]
        %v268 = vld [vmem:[%s2] sm:$0x1]
        %v270 = vlaneseq
        %v271 = vshrl.u32 %v270, 7
        %v272 = vsub.s32 0, %v271
        %v273 = vrot.slane %v268, %v272
        %v277 = vlaneseq
        %v278 = vand.u32 %v277, 127
        %v279 = vlaneseq
        %v280 = vshrl.u32 %v279, 7
        %v281 = vsub.s32 %v278, %v280
        %v282 = vrot.slane %v265, %v281
        %v283 = vlaneseq
        %v284 = vshrl.u32 %v283, 7
        %v285 = vsub.s32 %v278, %v284
        %v286 = vrot.slane %v266, %v285
        %vm287 = vcmask 1041409
        %v288 = vsel %vm287, %v286, %v282
        %vm289 = vcmask 31744
        %v290 = vsel %vm289, %v288, 0
        %v293 = vsel %vm254, %v267, 0
        %295 = vmatprep.subr.mxu0 0.0
        %296 = vmatpush1.msra.mxu0 %v293
        %297 = vmatprep.subr.mxu0 0.0
        %298 = vmatpush1.msra.mxu0 0.0
        %299 = vmatprep.subr.mxu0 0.0
        %300 = vmatpush1.msra.mxu0 0.0
        %301 = vmatprep.subr.mxu0 0.0
        %302 = vmatpush1.msra.mxu0 0.0
        %303 = vmatprep.subr.mxu0 0.0
        %304 = vmatpush1.msra.mxu0 0.0
        %305 = vmatprep.subr.mxu0 0.0
        %306 = vmatpush1.msra.mxu0 0.0
        %307 = vmatprep.subr.mxu0 0.0
        %308 = vmatpush1.msra.mxu0 0.0
        %309 = vmatprep.subr.mxu0 0.0
        %310 = vmatpush1.msra.mxu0 0.0
        %311 = vmatprep.subr.mxu0 0.0
        %312 = vmatpush1.msra.mxu0 0.0
        %313 = vmatprep.subr.mxu0 0.0
        %314 = vmatpush1.msra.mxu0 0.0
        %315 = vmatprep.subr.mxu0 0.0
        %316 = vmatpush1.msra.mxu0 0.0
        %317 = vmatprep.subr.mxu0 0.0
        %318 = vmatpush1.msra.mxu0 0.0
        %319 = vmatprep.subr.mxu0 0.0
        %320 = vmatpush1.msra.mxu0 0.0
        %321 = vmatprep.subr.mxu0 0.0
        %322 = vmatpush1.msra.mxu0 0.0
        %323 = vmatprep.subr.mxu0 0.0
        %324 = vmatpush1.msra.mxu0 0.0
        %325 = vmatprep.subr.mxu0 0.0
        %326 = vmatpush1.msra.mxu0 0.0
        %327 = vmatprep.subr.mxu0 0.0
        %328 = vmatpush1.msra.mxu0 0.0
        %329 = vmatprep.subr.mxu0 0.0
        %330 = vmatpush1.msra.mxu0 0.0
        %331 = vmatprep.subr.mxu0 0.0
        %332 = vmatpush1.msra.mxu0 0.0
        %333 = vmatprep.subr.mxu0 0.0
        %334 = vmatpush1.msra.mxu0 0.0
        %335 = vmatprep.subr.mxu0 0.0
        %336 = vmatpush1.msra.mxu0 0.0
        %337 = vmatprep.subr.mxu0 0.0
        %338 = vmatpush1.msra.mxu0 0.0
        %339 = vmatprep.subr.mxu0 0.0
        %340 = vmatpush1.msra.mxu0 0.0
        %341 = vmatprep.subr.mxu0 0.0
        %342 = vmatpush1.msra.mxu0 0.0
        %343 = vmatprep.subr.mxu0 0.0
        %344 = vmatpush1.msra.mxu0 0.0
        %345 = vmatprep.subr.mxu0 0.0
        %346 = vmatpush1.msra.mxu0 0.0
        %347 = vmatprep.subr.mxu0 0.0
        %348 = vmatpush1.msra.mxu0 0.0
        %349 = vmatprep.subr.mxu0 0.0
        %350 = vmatpush1.msra.mxu0 0.0
        %351 = vmatprep.subr.mxu0 0.0
        %352 = vmatpush1.msra.mxu0 0.0
        %353 = vmatprep.subr.mxu0 0.0
        %354 = vmatpush1.msra.mxu0 0.0
        %355 = vmatprep.subr.mxu0 0.0
        %356 = vmatpush1.msra.mxu0 0.0
        %357 = vmatprep.subr.mxu0 0.0
        %358 = vmatpush1.msra.mxu0 0.0
        %359 = vmatprep.mubr.f32.mxu0 0.0
        %360 = vmatmul.mubr.f32.gmra.mrb[0].mxu0 %v290
        %v361 = vpop.f32.mrb[0].mxu0
        %v362 = vadd.f32 %v273, %v361
        %v363 = vpop.f32.mrb[0].mxu0
        %364 = vdwg.mxu0
        %v365 = vmax.f32 %v362, 0.0
        %v366 = vld [vmem:[%s3] sm:$0x3]
        %v367 = vld [vmem:[%s4] sm:$0x1]
        %v369 = vlaneseq
        %v370 = vshrl.u32 %v369, 7
        %v371 = vsub.s32 0, %v370
        %v372 = vrot.slane %v367, %v371
        %vm374 = vcmask 15360
        %v376 = vsel %vm374, %v365, 0
        %vm378 = vcmask 1041408
        %v380 = vsel %vm378, %v366, 0
        %382 = vmatprep.subr.mxu0 0.0
        %383 = vmatpush1.msra.mxu0 %v380
        %384 = vmatprep.subr.mxu0 0.0
        %385 = vmatpush1.msra.mxu0 0.0
        %386 = vmatprep.subr.mxu0 0.0
        %387 = vmatpush1.msra.mxu0 0.0
        %388 = vmatprep.subr.mxu0 0.0
        %389 = vmatpush1.msra.mxu0 0.0
        %390 = vmatprep.subr.mxu0 0.0
        %391 = vmatpush1.msra.mxu0 0.0
        %392 = vmatprep.subr.mxu0 0.0
        %393 = vmatpush1.msra.mxu0 0.0
        %394 = vmatprep.subr.mxu0 0.0
        %395 = vmatpush1.msra.mxu0 0.0
        %396 = vmatprep.subr.mxu0 0.0
        %397 = vmatpush1.msra.mxu0 0.0
        %398 = vmatprep.subr.mxu0 0.0
        %399 = vmatpush1.msra.mxu0 0.0
        %400 = vmatprep.subr.mxu0 0.0
        %401 = vmatpush1.msra.mxu0 0.0
        %402 = vmatprep.subr.mxu0 0.0
        %403 = vmatpush1.msra.mxu0 0.0
        %404 = vmatprep.subr.mxu0 0.0
        %405 = vmatpush1.msra.mxu0 0.0
        %406 = vmatprep.subr.mxu0 0.0
        %407 = vmatpush1.msra.mxu0 0.0
        %408 = vmatprep.subr.mxu0 0.0
        %409 = vmatpush1.msra.mxu0 0.0
        %410 = vmatprep.subr.mxu0 0.0
        %411 = vmatpush1.msra.mxu0 0.0
        %412 = vmatprep.subr.mxu0 0.0
        %413 = vmatpush1.msra.mxu0 0.0
        %414 = vmatprep.subr.mxu0 0.0
        %415 = vmatpush1.msra.mxu0 0.0
        %416 = vmatprep.subr.mxu0 0.0
        %417 = vmatpush1.msra.mxu0 0.0
        %418 = vmatprep.subr.mxu0 0.0
        %419 = vmatpush1.msra.mxu0 0.0
        %420 = vmatprep.subr.mxu0 0.0
        %421 = vmatpush1.msra.mxu0 0.0
        %422 = vmatprep.subr.mxu0 0.0
        %423 = vmatpush1.msra.mxu0 0.0
        %424 = vmatprep.subr.mxu0 0.0
        %425 = vmatpush1.msra.mxu0 0.0
        %426 = vmatprep.subr.mxu0 0.0
        %427 = vmatpush1.msra.mxu0 0.0
        %428 = vmatprep.subr.mxu0 0.0
        %429 = vmatpush1.msra.mxu0 0.0
        %430 = vmatprep.subr.mxu0 0.0
        %431 = vmatpush1.msra.mxu0 0.0
        %432 = vmatprep.subr.mxu0 0.0
        %433 = vmatpush1.msra.mxu0 0.0
        %434 = vmatprep.subr.mxu0 0.0
        %435 = vmatpush1.msra.mxu0 0.0
        %436 = vmatprep.subr.mxu0 0.0
        %437 = vmatpush1.msra.mxu0 0.0
        %438 = vmatprep.subr.mxu0 0.0
        %439 = vmatpush1.msra.mxu0 0.0
        %440 = vmatprep.subr.mxu0 0.0
        %441 = vmatpush1.msra.mxu0 0.0
        %442 = vmatprep.subr.mxu0 0.0
        %443 = vmatpush1.msra.mxu0 0.0
        %444 = vmatprep.subr.mxu0 0.0
        %445 = vmatpush1.msra.mxu0 0.0
        %446 = vmatprep.mubr.f32.mxu0 0.0
        %447 = vmatmul.mubr.f32.gmra.mrb[0].mxu0 %v376
        %v448 = vpop.f32.mrb[0].mxu0
        %v449 = vadd.f32 %v372, %v448
        %v450 = vpop.f32.mrb[0].mxu0
        %451 = vdwg.mxu0
        %v452 = vxor.u32 %v449, 2147483648
        %v453 = vmul.f32 %v452, 1.442695
        %v454 = vpow.pop %v453
        %v455 = vadd.f32 %v454, 1.0
        %v456 = vrcp.pop %v455
        %v457 = vmul.f32 1.0, %v456
        %v458 = vlaneseq
        %v459 = vshrl.u32 %v458, 7
        %v460 = vsub.s32 0, %v459
        %v461 = vrot.slane %v457, %v460
        %463 = vbcast.lane.b32.xlu0 %v461, 256
        %v464 = vpop.permute.xlu0 %463
        %v465 = vlaneseq
        %v466 = vshrl.u32 %v465, 7
        %v467 = vsub.s32 1, %v466
        %v468 = vrot.slane %v457, %v467
        %470 = vbcast.lane.b32.xlu0 %v468, 256
        %v471 = vpop.permute.xlu0 %470
        %v475 = vunpack.c.l.s4 839922192
        %v476 = vunpack.c.0.s8 %v475
        %v477 = vlaneseq
        %v478 = vshrl.u32 %v477, 7
        %v479 = vsub.s32 %v476, %v478
        %v480 = vrot.slane %v464, %v479
        %v482 = vunpack.c.l.s4 839922192
        %v483 = vunpack.c.0.s8 %v482
        %v484 = vlaneseq
        %v485 = vshrl.u32 %v484, 7
        %v486 = vsub.s32 %v483, %v485
        %v487 = vrot.slane %v471, %v486
        %v490 = vmul.f32 %v246, %v480
        %v491 = vmul.f32 %v247, %v487
        %492 = vst [vmem:[%s243] sm:$0xff] %v490
        %493 = vst [vmem:[%s243 + $0x8] sm:$0xff] %v491
        %s494 = sand.u32 %s140, 1
        %s495 = scalar_lea.sflag [#allocation4], %s494
        %s496 = sand.u32 %s140, 1
        %s497 = smul.addr %s496, 16
        %s498 = scalar_lea.vmem [#allocation5], %s497
        // Predicated region
        $region45: #{tpu_custom_call.1} parent=39 // pred_check
          %p499 = pneg %p150
        $region46: #{tpu_custom_call.1} parent=39 // pred_check_branch
          %501 = sbr.rel (%p499) target = $region48
        $region47: #{tpu_custom_call.1} parent=39 // pred_region
          %s502 = smul.u32 2, %s22
          %s504 = ssub.s32 256, 256
          %505 = vsyncadd %s495, %s504
          %s506 = smul.addr %s502, 2
          %s507 = smul.addr %s506, 64
          %s508 = scalar_lea.hbm %s5, %s507
          %s509 = sshll.u32 %s498, 4
          %s510 = int_to_ptr.vmem [resolvable:$true] %s509
          %515 = dma.vmem_to_hbm [thread:$0]  %s510, 256, %s508, %s495, 128, 128, 8
        $region48: #{tpu_custom_call.1} parent=39 // pred_fallthru
          _
      $region40: #{tpu_custom_call.1} parent=5 // pred_fallthru
        _
      %p516 = scmp.le.s32.totalorder 2, %s17
      // Predicated region
      $region49: #{tpu_custom_call.1} parent=5 // pred_check
        %p517 = pneg %p516
      $region50: #{tpu_custom_call.1} parent=5 // pred_check_branch
        %519 = sbr.rel (%p517) target = $region52
      $region51: #{tpu_custom_call.1} parent=5 // pred_region
        %s520 = ssub.s32 %s17, 2
        // Predicated region
        $region53: #{tpu_custom_call.1} parent=51 // pred_check
          %p521 = pneg %p156
        $region54: #{tpu_custom_call.1} parent=51 // pred_check_branch
          %523 = sbr.rel (%p521) target = $region56
        $region55: #{tpu_custom_call.1} parent=51 // pred_region
          %s524 = sand.u32 %s141, 1
          %s525 = scalar_lea.sflag [#allocation4], %s524
          %s526 = sand.u32 %s141, 1
          %s527 = smul.addr %s526, 16
          %s528 = scalar_lea.vmem [#allocation5], %s527
          %529 = dma.done %s525, 256
        $region56: #{tpu_custom_call.1} parent=51 // pred_fallthru
          _
      $region52: #{tpu_custom_call.1} parent=5 // pred_fallthru
        _
    $region6: #{tpu_custom_call.1} parent=1 // loop_footer
      %s21 = sadd.s32 1, %s17
    $region7: #{tpu_custom_call.1} parent=1 // loop_footer_branch
      %16 = sbr.rel target = $region3
    $region8: #{tpu_custom_call.1} parent=1 // loop_exit
      _
    %530 = vsyncpa [#allocation3], 1
    %s531 = scalar_lea.sflag [#allocation3], 1
    %532 = vsyncpa %s531, 1
    %533 = vsyncpa [#allocation4], 1
    %s534 = scalar_lea.sflag [#allocation4], 1
    %535 = vsyncpa %s534, 1

</llo_original>
